<compile_context>
chip_gen: v6e
topology: v6e:2x2x1
jax: 0.10.0
libtpu: 0.0.40
codegen_flags: <defaults>
</compile_context>

<pallas_src>
import jax
import jax.numpy as jnp
from jax.experimental import pallas as pl
from jax.experimental.pallas import tpu as pltpu

F_IN, F_PAD, H1, H2 = 13, 16, 16, 8


def _mlp_kernel(xT_ref, w1_ref, b1_ref, w2_ref, b2_ref, w3_ref, b3_ref, o_ref):
    x = xT_ref[...]                                            # (F_PAD, TB)
    # fc1 + ReLU: (16,16) @ (16,TB) on the MXU; bias (16,1) lane-broadcast.
    h1 = jnp.dot(w1_ref[...], x, preferred_element_type=jnp.float32)
    h1 = jnp.maximum(h1 + b1_ref[...], 0.0)                    # (16, TB)
    # fc2 + ReLU: (8,16) @ (16,TB).
    h2 = jnp.dot(w2_ref[...], h1, preferred_element_type=jnp.float32)
    h2 = jnp.maximum(h2 + b2_ref[...], 0.0)                    # (8, TB)
    # fc3 + sigmoid on VPU/XLU: rank-1 contraction as broadcast-mul + sublane
    # reduce; scalar bias comes from SMEM. Output block is lane-dense (1, TB).
    logits = jnp.sum(w3_ref[...] * h2, axis=0, keepdims=True) + b3_ref[0]
    o_ref[...] = 1.0 / (1.0 + jnp.exp(-logits))


def _round_up(a, b):
    return ((a + b - 1) // b) * b


def heart_disease_forward(x, params, *, max_batch_tile=2048):
    """x: (B, 13) float32 -> (B, 1) float32 (sigmoid output)."""
    w1, b1, w2, b2, w3, b3 = params
    B = x.shape[0]

    bp0 = _round_up(max(B, 1), 128)          # lane-multiple batch
    tb = min(max_batch_tile, bp0)            # large batch tile (multiple of 128)
    bp = _round_up(bp0, tb)                  # padded batch, multiple of the tile

    # Wrapper-side layout plumbing: features 13 -> 16 (zero rows contribute
    # nothing), batch moved onto the lane axis. Padded batch columns are zero.
    xT = jnp.zeros((F_PAD, bp), jnp.float32).at[:F_IN, :B].set(x.T)

    const = lambda shape: pl.BlockSpec(shape, lambda i: (0, 0))

    out = pl.pallas_call(
        _mlp_kernel,
        out_shape=jax.ShapeDtypeStruct((1, bp), jnp.float32),
        grid=(bp // tb,),
        in_specs=[
            pl.BlockSpec((F_PAD, tb), lambda i: (0, i)),        # x tile (pipelined)
            const((H1, F_PAD)),                                 # w1 (resident)
            const((H1, 1)),                                     # b1
            const((H2, H1)),                                    # w2
            const((H2, 1)),                                     # b2
            const((H2, 1)),                                     # w3 column
            pl.BlockSpec(memory_space=pltpu.MemorySpace.SMEM),  # b3 scalar in SMEM
        ],
        out_specs=pl.BlockSpec((1, tb), lambda i: (0, i)),      # lane-dense output
        compiler_params=pltpu.CompilerParams(
            dimension_semantics=("parallel",)),
    )(xT, w1, b1, w2, b2, w3, b3)

    return out[0, :B].reshape(B, 1)


def init_params(key):
    """PyTorch-default-style init (U(-1/sqrt(fan_in), 1/sqrt(fan_in))),
    stored in kernel-ready transposed/padded shapes."""
    k1, k2, k3, k4, k5, k6 = jax.random.split(key, 6)

    def uni(k, shape, fan_in):
        bound = 1.0 / jnp.sqrt(jnp.float32(fan_in))
        return jax.random.uniform(k, shape, jnp.float32, -bound, bound)

    w1_real = uni(k1, (H1, F_IN), F_IN)                         # (16, 13) [out, in]
    w1 = jnp.zeros((H1, F_PAD), jnp.float32).at[:, :F_IN].set(w1_real)
    b1 = uni(k2, (H1, 1), F_IN)                                 # (16, 1)
    w2 = uni(k3, (H2, H1), H1)                                  # (8, 16) [out, in]
    b2 = uni(k4, (H2, 1), H1)                                   # (8, 1)
    w3 = uni(k5, (H2, 1), H2)                                   # (8, 1) column of (1, 8)
    b3 = uni(k6, (1,), H2)                                      # scalar
    return (w1, b1, w2, b2, w3, b3)


if __name__ == "__main__":
    key = jax.random.PRNGKey(0)
    pkey, xkey = jax.random.split(key)

    params = init_params(pkey)
    x = jax.random.normal(xkey, (8, F_IN), dtype=jnp.float32)   # batch=8, 13 features

    out = heart_disease_forward(x, params)
    jax.block_until_ready(out)

    # Plain-JAX reference (same math, row layout).
    w1, b1, w2, b2, w3, b3 = params
    h1 = jnp.maximum(x @ w1[:, :F_IN].T + b1[:, 0], 0.0)
    h2 = jnp.maximum(h1 @ w2.T + b2[:, 0], 0.0)
    ref = (1.0 / (1.0 + jnp.exp(-(h2 @ w3[:, 0] + b3))))[:, None]

    assert out.shape == (8, 1)
    assert jnp.allclose(out, ref, atol=1e-5), "mismatch vs reference"

    print("KERNEL_OK")
</pallas_src>

<mosaic_0001>
module attributes {stable_mosaic.version = 11 : i64} {
  func.func @_mlp_kernel(%arg0: i32, %arg1: memref<16x128xf32, #tpu.memory_space<vmem>>, %arg2: memref<16x16xf32, #tpu.memory_space<vmem>>, %arg3: memref<16x1xf32, #tpu.memory_space<vmem>>, %arg4: memref<8x16xf32, #tpu.memory_space<vmem>>, %arg5: memref<8x1xf32, #tpu.memory_space<vmem>>, %arg6: memref<8x1xf32, #tpu.memory_space<vmem>>, %arg7: memref<1xf32, #tpu.memory_space<smem>>, %arg8: memref<1x128xf32, #tpu.memory_space<vmem>>) attributes {dimension_semantics = [#tpu.dimension_semantics<parallel>], iteration_bounds = array<i64: 1>, scalar_prefetch = 0 : i64, scratch_operands = 0 : i64, tpu.core_type = #tpu.core_type<tc>, window_params = [{transform_indices = @transform_0, window_bounds = array<i64: 16, 128>}, {pipeline_mode = #tpu.pipeline_mode<synchronous>, transform_indices = @transform_1, window_bounds = array<i64: 16, 16>}, {pipeline_mode = #tpu.pipeline_mode<synchronous>, transform_indices = @transform_2, window_bounds = array<i64: 16, 1>}, {pipeline_mode = #tpu.pipeline_mode<synchronous>, transform_indices = @transform_3, window_bounds = array<i64: 8, 16>}, {pipeline_mode = #tpu.pipeline_mode<synchronous>, transform_indices = @transform_4, window_bounds = array<i64: 8, 1>}, {pipeline_mode = #tpu.pipeline_mode<synchronous>, transform_indices = @transform_5, window_bounds = array<i64: 8, 1>}, {transform_indices = @transform_6, window_bounds = array<i64: 1>}, {transform_indices = @transform_7, window_bounds = array<i64: 1, 128>}]} {
    %c0 = arith.constant 0 : index
    %c0_0 = arith.constant 0 : index
    %0 = vector.load %arg1[%c0, %c0_0] : memref<16x128xf32, #tpu.memory_space<vmem>>, vector<16x128xf32>
    %c0_1 = arith.constant 0 : index
    %c0_2 = arith.constant 0 : index
    %1 = vector.load %arg2[%c0_1, %c0_2] : memref<16x16xf32, #tpu.memory_space<vmem>>, vector<16x16xf32>
    %cst = arith.constant dense<0.000000e+00> : vector<16x128xf32>
    %2 = tpu.matmul %1, %0, %cst {dimension_numbers = #tpu.dot_dimension_numbers<[1], [0], [0], [1], [0, 0, 1, 1], [], []>} : vector<16x16xf32>, vector<16x128xf32>, vector<16x128xf32> -> vector<16x128xf32>
    %c0_3 = arith.constant 0 : index
    %c0_4 = arith.constant 0 : index
    %3 = vector.load %arg3[%c0_3, %c0_4] : memref<16x1xf32, #tpu.memory_space<vmem>>, vector<16x1xf32>
    %4 = vector.broadcast %3 : vector<16x1xf32> to vector<16x128xf32>
    %5 = arith.addf %2, %4 : vector<16x128xf32>
    %cst_5 = arith.constant 0.000000e+00 : f32
    %6 = vector.broadcast %cst_5 : f32 to vector<16x128xf32>
    %7 = arith.maximumf %5, %6 : vector<16x128xf32>
    %c0_6 = arith.constant 0 : index
    %c0_7 = arith.constant 0 : index
    %8 = vector.load %arg4[%c0_6, %c0_7] : memref<8x16xf32, #tpu.memory_space<vmem>>, vector<8x16xf32>
    %cst_8 = arith.constant dense<0.000000e+00> : vector<8x128xf32>
    %9 = tpu.matmul %8, %7, %cst_8 {dimension_numbers = #tpu.dot_dimension_numbers<[1], [0], [0], [1], [0, 0, 1, 1], [], []>} : vector<8x16xf32>, vector<16x128xf32>, vector<8x128xf32> -> vector<8x128xf32>
    %c0_9 = arith.constant 0 : index
    %c0_10 = arith.constant 0 : index
    %10 = vector.load %arg5[%c0_9, %c0_10] : memref<8x1xf32, #tpu.memory_space<vmem>>, vector<8x1xf32>
    %11 = vector.broadcast %10 : vector<8x1xf32> to vector<8x128xf32>
    %12 = arith.addf %9, %11 : vector<8x128xf32>
    %cst_11 = arith.constant 0.000000e+00 : f32
    %13 = vector.broadcast %cst_11 : f32 to vector<8x128xf32>
    %14 = arith.maximumf %12, %13 : vector<8x128xf32>
    %c0_12 = arith.constant 0 : index
    %c0_13 = arith.constant 0 : index
    %15 = vector.load %arg6[%c0_12, %c0_13] : memref<8x1xf32, #tpu.memory_space<vmem>>, vector<8x1xf32>
    %16 = vector.broadcast %15 : vector<8x1xf32> to vector<8x128xf32>
    %17 = arith.mulf %16, %14 : vector<8x128xf32>
    %cst_14 = arith.constant dense<0.000000e+00> : vector<128xf32>
    %18 = vector.multi_reduction <add>, %17, %cst_14 [0] : vector<8x128xf32> to vector<128xf32>
    %19 = vector.shape_cast %18 : vector<128xf32> to vector<1x128xf32>
    %c0_15 = arith.constant 0 : index
    %20 = memref.load %arg7[%c0_15] : memref<1xf32, #tpu.memory_space<smem>>
    %21 = vector.broadcast %20 : f32 to vector<1x128xf32>
    %22 = arith.addf %19, %21 : vector<1x128xf32>
    %cst_16 = arith.constant 0.000000e+00 : f32
    %23 = vector.broadcast %cst_16 : f32 to vector<1x128xf32>
    %24 = arith.subf %23, %22 : vector<1x128xf32>
    %25 = math.exp %24 : vector<1x128xf32>
    %cst_17 = arith.constant 1.000000e+00 : f32
    %26 = vector.broadcast %cst_17 : f32 to vector<1x128xf32>
    %27 = arith.addf %26, %25 : vector<1x128xf32>
    %cst_18 = arith.constant 1.000000e+00 : f32
    %28 = vector.broadcast %cst_18 : f32 to vector<1x128xf32>
    %29 = arith.divf %28, %27 : vector<1x128xf32>
    %c0_19 = arith.constant 0 : index
    %c0_20 = arith.constant 0 : index
    %30 = vector.load %arg8[%c0_19, %c0_20] : memref<1x128xf32, #tpu.memory_space<vmem>>, vector<1x128xf32>
    tpu.vector_store %arg8[%c0_19, %c0_20], %29 {strides = array<i32>} : memref<1x128xf32, #tpu.memory_space<vmem>>, vector<1x128xf32>,
    return
  }
  func.func @transform_0(%arg0: i32) -> (i32, i32) {
    %c0_i32 = arith.constant 0 : i32
    %c0_i32_0 = arith.constant 0 : i32
    return %c0_i32, %arg0 : i32, i32
  }
  func.func @transform_1(%arg0: i32) -> (i32, i32) {
    %c0_i32 = arith.constant 0 : i32
    %c0_i32_0 = arith.constant 0 : i32
    %c0_i32_1 = arith.constant 0 : i32
    return %c0_i32, %c0_i32_0 : i32, i32
  }
  func.func @transform_2(%arg0: i32) -> (i32, i32) {
    %c0_i32 = arith.constant 0 : i32
    %c0_i32_0 = arith.constant 0 : i32
    %c0_i32_1 = arith.constant 0 : i32
    return %c0_i32, %c0_i32_0 : i32, i32
  }
  func.func @transform_3(%arg0: i32) -> (i32, i32) {
    %c0_i32 = arith.constant 0 : i32
    %c0_i32_0 = arith.constant 0 : i32
    %c0_i32_1 = arith.constant 0 : i32
    return %c0_i32, %c0_i32_0 : i32, i32
  }
  func.func @transform_4(%arg0: i32) -> (i32, i32) {
    %c0_i32 = arith.constant 0 : i32
    %c0_i32_0 = arith.constant 0 : i32
    %c0_i32_1 = arith.constant 0 : i32
    return %c0_i32, %c0_i32_0 : i32, i32
  }
  func.func @transform_5(%arg0: i32) -> (i32, i32) {
    %c0_i32 = arith.constant 0 : i32
    %c0_i32_0 = arith.constant 0 : i32
    %c0_i32_1 = arith.constant 0 : i32
    return %c0_i32, %c0_i32_0 : i32, i32
  }
  func.func @transform_6(%arg0: i32) -> i32 {
    %c0_i32 = arith.constant 0 : i32
    %c0_i32_0 = arith.constant 0 : i32
    return %c0_i32 : i32
  }
  func.func @transform_7(%arg0: i32) -> (i32, i32) {
    %c0_i32 = arith.constant 0 : i32
    %c0_i32_0 = arith.constant 0 : i32
    return %c0_i32, %arg0 : i32, i32
  }
}

</mosaic_0001>

<llo_original>
// kernel: tpu_custom_call.1
$region0: #{tpu_custom_call.1}
  #allocation0 [shape = 'u32[]', space=smem, size = 0x4, offset = 0x4, fixed_abs, tag = 'smem constant byte address 0x4 - core index']
  #allocation1 [shape = 'u32[144,128]{1,0:T(1,128)}', space=vmem, size = 0x12000, scoped, tag = 'internal scratch']
  #allocation2 [shape = 'f32[1]{0:T(128)S(6)}', space=smem, size = 0x200, scoped, tag = 'scoped memory for tpu_custom_call.1']
  %s0 = inlined_call_operand.vmem [shape: f32[16,128], index: 0, kind: input, shape index: {}]
  %s1 = inlined_call_operand.vmem [shape: f32[16,16], index: 1, kind: input, shape index: {}]
  %s2 = inlined_call_operand.vmem [shape: f32[16,1], index: 2, kind: input, shape index: {}]
  %s3 = inlined_call_operand.vmem [shape: f32[8,16], index: 3, kind: input, shape index: {}]
  %s4 = inlined_call_operand.vmem [shape: f32[8,1], index: 4, kind: input, shape index: {}]
  %s5 = inlined_call_operand.vmem [shape: f32[8,1], index: 5, kind: input, shape index: {}]
  %s6 = inlined_call_operand.<no memory space> [shape: f32[1], index: 6, kind: input, shape index: {}]
  %s7 = inlined_call_operand.hbm [shape: f32[1,128], index: 7, kind: output, shape index: {}]
  %s8 = sld [smem:[#allocation0]]
  $region38: #{tpu_custom_call.1} parent=0
    _
  %s10 = ssub.s32 1, %s8
  %s11 = scalar_select 0, %s10, %s8
  %12 = sst [smem:[#allocation2]] %s6
  $region1: #{tpu_custom_call.1} parent=0
    #allocation3 [shape = 'u8[512]{0}', space=vmem, size = 0x400, scoped, tag = 'output window, operand 0, single buffered']
    #allocation4 [shape = 's32[1]{0}', space=sflag, size = 0x4, scoped, tag = 'scoped memory for tpu_custom_call.1']
    %13 = vsyncpa [#allocation4], 0
    // Predicated region
    $region2: #{tpu_custom_call.1} parent=1 // pred_check
      _
    $region3: #{tpu_custom_call.1} parent=1 // pred_check_branch
      %15 = sbr.rel (0) target = $region5
    $region4: #{tpu_custom_call.1} parent=1 // pred_region
      _
    $region5: #{tpu_custom_call.1} parent=1 // pred_fallthru
      _
    // Predicated region
    $region6: #{tpu_custom_call.1} parent=1 // pred_check
      _
    $region7: #{tpu_custom_call.1} parent=1 // pred_check_branch
      %17 = sbr.rel (0) target = $region9
    $region8: #{tpu_custom_call.1} parent=1 // pred_region
      _
    $region9: #{tpu_custom_call.1} parent=1 // pred_fallthru
      _
    // Predicated region
    $region10: #{tpu_custom_call.1} parent=1 // pred_check
      _
    $region11: #{tpu_custom_call.1} parent=1 // pred_check_branch
      %19 = sbr.rel (0) target = $region13
    $region12: #{tpu_custom_call.1} parent=1 // pred_region
      _
    $region13: #{tpu_custom_call.1} parent=1 // pred_fallthru
      _
    // Predicated region
    $region14: #{tpu_custom_call.1} parent=1 // pred_check
      _
    $region15: #{tpu_custom_call.1} parent=1 // pred_check_branch
      %21 = sbr.rel (0) target = $region17
    $region16: #{tpu_custom_call.1} parent=1 // pred_region
      _
    $region17: #{tpu_custom_call.1} parent=1 // pred_fallthru
      _
    // Predicated region
    $region18: #{tpu_custom_call.1} parent=1 // pred_check
      _
    $region19: #{tpu_custom_call.1} parent=1 // pred_check_branch
      %23 = sbr.rel (0) target = $region21
    $region20: #{tpu_custom_call.1} parent=1 // pred_region
      _
    $region21: #{tpu_custom_call.1} parent=1 // pred_fallthru
      _
    // Predicated region
    $region22: #{tpu_custom_call.1} parent=1 // pred_check
      _
    $region23: #{tpu_custom_call.1} parent=1 // pred_check_branch
      %25 = sbr.rel (0) target = $region25
    $region24: #{tpu_custom_call.1} parent=1 // pred_region
      _
    $region25: #{tpu_custom_call.1} parent=1 // pred_fallthru
      _
    // Predicated region
    $region26: #{tpu_custom_call.1} parent=1 // pred_check
      _
    $region27: #{tpu_custom_call.1} parent=1 // pred_check_branch
      %27 = sbr.rel (0) target = $region29
    $region28: #{tpu_custom_call.1} parent=1 // pred_region
      _
    $region29: #{tpu_custom_call.1} parent=1 // pred_fallthru
      _
    %v28 = vld [vmem:[%s0] sm:$0xff]
    %v29 = vld [vmem:[%s0 + $0x8] sm:$0xff]
    %v30 = vld [vmem:[%s1] sm:$0xff]
    %v31 = vld [vmem:[%s1 + $0x8] sm:$0xff]
    %v32 = vld [vmem:[%s2] sm:$0xff]
    %v33 = vld [vmem:[%s2 + $0x8] sm:$0xff]
    %35 = vset.pattern.permute.xlu0 0
    %36 = vperm.xlu0 %35, %v32
    %v37 = vpop.permute.xlu0 %36
    %40 = vset.pattern.permute.xlu0 0
    %41 = vperm.xlu0 %40, %v33
    %v42 = vpop.permute.xlu0 %41
    %vm44 = vcmask 130048
    %v46 = vsel %vm44, %v30, 0
    %v49 = vsel %vm44, %v31, 0
    %51 = vmatprep.subr.mxu0 0.0
    %52 = vmatpush1.msra.mxu0 0.0
    %53 = vmatprep.subr.mxu0 0.0
    %54 = vmatpush1.msra.mxu0 0.0
    %55 = vmatprep.subr.mxu0 0.0
    %56 = vmatpush1.msra.mxu0 0.0
    %57 = vmatprep.subr.mxu0 0.0
    %58 = vmatpush1.msra.mxu0 0.0
    %59 = vmatprep.subr.mxu0 0.0
    %60 = vmatpush1.msra.mxu0 0.0
    %61 = vmatprep.subr.mxu0 0.0
    %62 = vmatpush1.msra.mxu0 0.0
    %63 = vmatprep.subr.mxu0 0.0
    %64 = vmatpush1.msra.mxu0 0.0
    %65 = vmatprep.subr.mxu0 0.0
    %66 = vmatpush1.msra.mxu0 0.0
    %67 = vmatprep.subr.mxu0 0.0
    %68 = vmatpush1.msra.mxu0 0.0
    %69 = vmatprep.subr.mxu0 0.0
    %70 = vmatpush1.msra.mxu0 0.0
    %71 = vmatprep.subr.mxu0 0.0
    %72 = vmatpush1.msra.mxu0 0.0
    %73 = vmatprep.subr.mxu0 0.0
    %74 = vmatpush1.msra.mxu0 0.0
    %75 = vmatprep.subr.mxu0 0.0
    %76 = vmatpush1.msra.mxu0 0.0
    %77 = vmatprep.subr.mxu0 0.0
    %78 = vmatpush1.msra.mxu0 0.0
    %79 = vmatprep.subr.mxu0 0.0
    %80 = vmatpush1.msra.mxu0 %v29
    %81 = vmatprep.subr.mxu0 0.0
    %82 = vmatpush1.msra.mxu0 %v28
    %83 = vmatprep.subr.mxu0 0.0
    %84 = vmatpush2.msra.mxu0 0.0
    %85 = vmatprep.subr.mxu0 0.0
    %86 = vmatpush2.msra.mxu0 0.0
    %87 = vmatprep.subr.mxu0 0.0
    %88 = vmatpush2.msra.mxu0 0.0
    %89 = vmatprep.subr.mxu0 0.0
    %90 = vmatpush2.msra.mxu0 0.0
    %91 = vmatprep.subr.mxu0 0.0
    %92 = vmatpush2.msra.mxu0 0.0
    %93 = vmatprep.subr.mxu0 0.0
    %94 = vmatpush2.msra.mxu0 0.0
    %95 = vmatprep.subr.mxu0 0.0
    %96 = vmatpush2.msra.mxu0 0.0
    %97 = vmatprep.subr.mxu0 0.0
    %98 = vmatpush2.msra.mxu0 0.0
    %99 = vmatprep.subr.mxu0 0.0
    %100 = vmatpush2.msra.mxu0 0.0
    %101 = vmatprep.subr.mxu0 0.0
    %102 = vmatpush2.msra.mxu0 0.0
    %103 = vmatprep.subr.mxu0 0.0
    %104 = vmatpush2.msra.mxu0 0.0
    %105 = vmatprep.subr.mxu0 0.0
    %106 = vmatpush2.msra.mxu0 0.0
    %107 = vmatprep.subr.mxu0 0.0
    %108 = vmatpush2.msra.mxu0 0.0
    %109 = vmatprep.subr.mxu0 0.0
    %110 = vmatpush2.msra.mxu0 0.0
    %111 = vmatprep.subr.mxu0 0.0
    %112 = vmatpush2.msra.mxu0 0.0
    %113 = vmatprep.subr.mxu0 0.0
    %114 = vmatpush2.msra.mxu0 0.0
    %115 = vmatprep.mubr.f32.mxu0 0.0
    %116 = vmatmul.mubr.f32.gmra.mxu0 %v46
    %v117 = vpop.f32.mrf.mxu0
    %v118 = vadd.f32 %v37, %v117
    %v119 = vpop.f32.mrf.mxu0
    %120 = vmatprep.mubr.f32.mxu0 0.0
    %121 = vmatmul.mubr.f32.gmra.mxu0 %v49
    %v122 = vpop.f32.mrf.mxu0
    %v123 = vadd.f32 %v42, %v122
    %v124 = vpop.f32.mrf.mxu0
    %125 = vdwg.mxu0
    %v126 = vmax.f32 %v118, 0.0
    %v127 = vmax.f32 %v123, 0.0
    %v128 = vld [vmem:[%s3] sm:$0xff]
    %v129 = vld [vmem:[%s4] sm:$0xff]
    %131 = vset.pattern.permute.xlu0 0
    %132 = vperm.xlu0 %131, %v129
    %v133 = vpop.permute.xlu0 %132
    %v136 = vsel %vm44, %v128, 0
    %138 = vmatprep.subr.mxu0 0.0
    %139 = vmatpush1.msra.mxu0 0.0
    %140 = vmatprep.subr.mxu0 0.0
    %141 = vmatpush1.msra.mxu0 0.0
    %142 = vmatprep.subr.mxu0 0.0
    %143 = vmatpush1.msra.mxu0 0.0
    %144 = vmatprep.subr.mxu0 0.0
    %145 = vmatpush1.msra.mxu0 0.0
    %146 = vmatprep.subr.mxu0 0.0
    %147 = vmatpush1.msra.mxu0 0.0
    %148 = vmatprep.subr.mxu0 0.0
    %149 = vmatpush1.msra.mxu0 0.0
    %150 = vmatprep.subr.mxu0 0.0
    %151 = vmatpush1.msra.mxu0 0.0
    %152 = vmatprep.subr.mxu0 0.0
    %153 = vmatpush1.msra.mxu0 0.0
    %154 = vmatprep.subr.mxu0 0.0
    %155 = vmatpush1.msra.mxu0 0.0
    %156 = vmatprep.subr.mxu0 0.0
    %157 = vmatpush1.msra.mxu0 0.0
    %158 = vmatprep.subr.mxu0 0.0
    %159 = vmatpush1.msra.mxu0 0.0
    %160 = vmatprep.subr.mxu0 0.0
    %161 = vmatpush1.msra.mxu0 0.0
    %162 = vmatprep.subr.mxu0 0.0
    %163 = vmatpush1.msra.mxu0 0.0
    %164 = vmatprep.subr.mxu0 0.0
    %165 = vmatpush1.msra.mxu0 0.0
    %166 = vmatprep.subr.mxu0 0.0
    %167 = vmatpush1.msra.mxu0 %v127
    %168 = vmatprep.subr.mxu0 0.0
    %169 = vmatpush1.msra.mxu0 %v126
    %170 = vmatprep.subr.mxu0 0.0
    %171 = vmatpush2.msra.mxu0 0.0
    %172 = vmatprep.subr.mxu0 0.0
    %173 = vmatpush2.msra.mxu0 0.0
    %174 = vmatprep.subr.mxu0 0.0
    %175 = vmatpush2.msra.mxu0 0.0
    %176 = vmatprep.subr.mxu0 0.0
    %177 = vmatpush2.msra.mxu0 0.0
    %178 = vmatprep.subr.mxu0 0.0
    %179 = vmatpush2.msra.mxu0 0.0
    %180 = vmatprep.subr.mxu0 0.0
    %181 = vmatpush2.msra.mxu0 0.0
    %182 = vmatprep.subr.mxu0 0.0
    %183 = vmatpush2.msra.mxu0 0.0
    %184 = vmatprep.subr.mxu0 0.0
    %185 = vmatpush2.msra.mxu0 0.0
    %186 = vmatprep.subr.mxu0 0.0
    %187 = vmatpush2.msra.mxu0 0.0
    %188 = vmatprep.subr.mxu0 0.0
    %189 = vmatpush2.msra.mxu0 0.0
    %190 = vmatprep.subr.mxu0 0.0
    %191 = vmatpush2.msra.mxu0 0.0
    %192 = vmatprep.subr.mxu0 0.0
    %193 = vmatpush2.msra.mxu0 0.0
    %194 = vmatprep.subr.mxu0 0.0
    %195 = vmatpush2.msra.mxu0 0.0
    %196 = vmatprep.subr.mxu0 0.0
    %197 = vmatpush2.msra.mxu0 0.0
    %198 = vmatprep.subr.mxu0 0.0
    %199 = vmatpush2.msra.mxu0 0.0
    %200 = vmatprep.subr.mxu0 0.0
    %201 = vmatpush2.msra.mxu0 0.0
    %202 = vmatprep.mubr.f32.mxu0 0.0
    %203 = vmatmul.mubr.f32.gmra.mxu0 %v136
    %v204 = vpop.f32.mrf.mxu0
    %v205 = vadd.f32 %v133, %v204
    %v206 = vpop.f32.mrf.mxu0
    %207 = vdwg.mxu0
    %v208 = vmax.f32 %v205, 0.0
    %v209 = vld [vmem:[%s5] sm:$0xff]
    %211 = vset.pattern.permute.xlu0 0
    %212 = vperm.xlu0 %211, %v209
    %v213 = vpop.permute.xlu0 %212
    %v215 = vmul.f32 %v213, %v208
    %v216 = vrot.slane %v215, 4
    %v217 = vadd.f32 %v215, %v216
    %v218 = vrot.slane %v217, 2
    %v219 = vadd.f32 %v217, %v218
    %v220 = vrot.slane %v219, 1
    %v221 = vadd.f32 %v219, %v220
    %s222 = sld [smem:[#allocation2]]
    %v223 = vstv %s222
    %v224 = vadd.f32 %v221, %v223
    %v225 = vsub.f32 0.0, %v224
    %v226 = vmul.f32 %v225, 1.442695
    %v227 = vpow.pop %v226
    %v228 = vadd.f32 %v227, 1.0
    %v229 = vrcp.pop %v228
    %v230 = vmul.f32 1.0, %v229
    %231 = vst [vmem:[#allocation3] sm:$0x1] %v230
    // Predicated region
    $region30: #{tpu_custom_call.1} parent=1 // pred_check
      _
    $region31: #{tpu_custom_call.1} parent=1 // pred_check_branch
      %233 = sbr.rel (0) target = $region33
    $region32: #{tpu_custom_call.1} parent=1 // pred_region
      %s235 = ssub.s32 16, 16
      %236 = vsyncadd [#allocation4], %s235
      %s238 = sshll.u32 [#allocation3], 4
      %s239 = int_to_ptr.vmem [resolvable:$true] %s238
      %241 = dma.vmem_to_hbm [thread:$0]  %s239, 16, %s7, [#allocation4]
    $region33: #{tpu_custom_call.1} parent=1 // pred_fallthru
      _
    // Predicated region
    $region34: #{tpu_custom_call.1} parent=1 // pred_check
      _
    $region35: #{tpu_custom_call.1} parent=1 // pred_check_branch
      %243 = sbr.rel (0) target = $region37
    $region36: #{tpu_custom_call.1} parent=1 // pred_region
      %244 = dma.done [#allocation4], 16
    $region37: #{tpu_custom_call.1} parent=1 // pred_fallthru
      _
    %245 = vsyncpa [#allocation4], 1

</llo_original>
